<compile_context>
chip_gen: v7x
topology: tpu7x:2x2x1
jax: 0.10.0
libtpu: 0.0.40
codegen_flags: <defaults>
</compile_context>

<pallas_src>
import math
import functools

import jax
import jax.numpy as jnp
from jax.experimental import pallas as pl
from jax.experimental.pallas import tpu as pltpu


def _scale_kernel(w_ref, o_ref, *, c):
    # Elementwise scale, computed in f32 so `c` is not quantized for narrow dtypes.
    o_ref[...] = (w_ref[...].astype(jnp.float32) * c).astype(o_ref.dtype)


def _round_up(x: int, m: int) -> int:
    return ((x + m - 1) // m) * m


# Below this size the plain-XLA path (which fuses into the consumer) always wins.
_SMALL_BYTES = 2 << 20


def _chip_tuning():
    """(target block bytes, vmem_limit_bytes or None) per TPU generation."""
    kind = ""
    try:
        kind = jax.devices()[0].device_kind.lower()
    except Exception:
        pass
    if "v7" in kind:
        # 4 buffers x 8 MiB = 32 MiB sits at the scoped default -> raise explicitly.
        return 8 << 20, 40 << 20
    if "v6" in kind:
        # 4 x 4 MiB = 16 MiB, comfortably under the 32 MiB scoped default.
        return 4 << 20, None
    # v5e (16 MiB scoped default) and unknown chips: stay conservative.
    return 2 << 20, None


def equalized_weight(weight: jax.Array, *, use_pallas=None) -> jax.Array:
    """Forward pass of EqualizedWeight: returns weight * 1/sqrt(prod(shape[1:])).

    use_pallas: None -> auto (size-based), True/False -> force path.
    """
    shape = weight.shape

    # Static scale, computed purely in Python (no device round-trip).
    prod_rest = 1
    for d in shape[1:]:
        prod_rest *= d
    c = 1.0 / math.sqrt(prod_rest) if prod_rest > 0 else 1.0

    total = int(weight.size)
    itemsize = jnp.dtype(weight.dtype).itemsize
    total_bytes = total * itemsize

    if use_pallas is None:
        use_pallas = total_bytes >= _SMALL_BYTES
    if not use_pallas or weight.ndim < 2:
        # Tiny / 1-D weights: plain XLA scale (fuses into the consumer for free).
        return weight * jnp.asarray(c, dtype=weight.dtype)

    ndim = weight.ndim
    n0 = shape[0]
    sublane = max(8, 32 // itemsize)  # f32 -> 8, bf16 -> 16, int8/fp8 -> 32
    target_block_bytes, vmem_limit = _chip_tuning()

    # VMEM footprint of one "leading row" (last two dims pad to (sublane,128) tiles).
    if ndim == 2:
        row_bytes = _round_up(shape[-1], 128) * itemsize
        min_block = sublane  # second-to-last block dim must be sublane-aligned (or full)
    else:
        inner = 1
        for d in shape[1:-2]:
            inner *= d
        row_bytes = (inner * _round_up(shape[-2], sublane)
                     * _round_up(shape[-1], 128) * itemsize)
        min_block = 1  # trailing dims are full extents; leading block is unconstrained

    if row_bytes > (16 << 20):
        # One leading row alone would blow VMEM (tiny leading dim, huge trailing dims).
        # TODO(synk): block trailing dims too for this rare layout instead of XLA fallback.
        return weight * jnp.asarray(c, dtype=weight.dtype)

    # Block the leading dim only, sized by bytes for the current chip.
    block0 = max(min_block, (target_block_bytes // row_bytes) // min_block * min_block)
    if block0 >= n0:
        block0 = n0
    # Keep >= ~4 grid steps when possible so both v7x TCs get >= 2 steps to pipeline.
    if pl.cdiv(n0, block0) < 4 and n0 >= 4 * min_block:
        block0 = min(n0, _round_up(pl.cdiv(n0, 4), min_block))

    block_shape = (block0,) + tuple(shape[1:])
    index_map = lambda i: (i,) + (0,) * (ndim - 1)
    grid = (pl.cdiv(n0, block0),)

    return pl.pallas_call(
        functools.partial(_scale_kernel, c=c),
        out_shape=jax.ShapeDtypeStruct(shape, weight.dtype),
        grid_spec=pltpu.PrefetchScalarGridSpec(
            num_scalar_prefetch=0,
            grid=grid,
            in_specs=[pl.BlockSpec(block_shape, index_map)],
            out_specs=pl.BlockSpec(block_shape, index_map),
        ),
        compiler_params=pltpu.CompilerParams(
            dimension_semantics=("parallel",),   # v7x: shard grid over 2 TCs
            vmem_limit_bytes=vmem_limit,
        ),
        cost_estimate=pl.CostEstimate(
            flops=total,
            transcendentals=0,
            bytes_accessed=2 * total_bytes,
        ),
    )(weight)


if __name__ == "__main__":
    key = jax.random.PRNGKey(0)
    k1, k2, k3 = jax.random.split(key, 3)

    # Case 1: tiny conv-style weight [4, 4, 3, 3] -> auto-selects the plain-XLA path.
    shape1 = (4, 4, 3, 3)
    w1 = jax.random.normal(k1, shape1, dtype=jnp.float32)
    out1 = jax.block_until_ready(equalized_weight(w1))
    c1 = 1.0 / math.sqrt(4 * 3 * 3)
    assert out1.shape == shape1
    assert jnp.allclose(out1, w1 * c1, atol=1e-6, rtol=1e-6)

    # Case 2: force the Pallas path on trailing dims that are not (8,128)-friendly —
    # exercises full-extent trailing block dims + masked edge stores, no repack.
    shape2 = (32, 7, 5, 5)
    w2 = jax.random.normal(k2, shape2, dtype=jnp.float32)
    out2 = jax.block_until_ready(equalized_weight(w2, use_pallas=True))
    c2 = 1.0 / math.sqrt(7 * 5 * 5)
    assert out2.shape == shape2
    assert jnp.allclose(out2, w2 * c2, atol=1e-6, rtol=1e-6)

    # Case 3: bf16 2-D weight, forced Pallas — exercises sublane-aligned leading-dim
    # blocking (multi-step grid) and the f32-internal scale.
    shape3 = (128, 1024)
    w3 = jax.random.normal(k3, shape3, dtype=jnp.float32).astype(jnp.bfloat16)
    out3 = jax.block_until_ready(equalized_weight(w3, use_pallas=True))
    c3 = 1.0 / math.sqrt(1024)
    ref3 = (w3.astype(jnp.float32) * c3).astype(jnp.bfloat16)
    assert out3.shape == shape3 and out3.dtype == jnp.bfloat16
    assert jnp.allclose(out3.astype(jnp.float32), ref3.astype(jnp.float32),
                        atol=1e-2, rtol=1e-2)

    print("KERNEL_OK")
</pallas_src>

<mosaic_0001>
module attributes {stable_mosaic.version = 11 : i64} {
  func.func @_scale_kernel(%arg0: i32, %arg1: memref<8x7x5x5xf32, #tpu.memory_space<vmem>>, %arg2: memref<8x7x5x5xf32, #tpu.memory_space<vmem>>) attributes {dimension_semantics = [#tpu.dimension_semantics<parallel>], iteration_bounds = array<i64: 4>, scalar_prefetch = 0 : i64, scratch_operands = 0 : i64, tpu.core_type = #tpu.core_type<tc>, window_params = [{transform_indices = @transform_0, window_bounds = array<i64: 8, 7, 5, 5>}, {transform_indices = @transform_1, window_bounds = array<i64: 8, 7, 5, 5>}]} {
    %c0 = arith.constant 0 : index
    %c0_0 = arith.constant 0 : index
    %c0_1 = arith.constant 0 : index
    %c0_2 = arith.constant 0 : index
    %0 = vector.load %arg1[%c0, %c0_0, %c0_1, %c0_2] : memref<8x7x5x5xf32, #tpu.memory_space<vmem>>, vector<8x7x5x5xf32>
    %cst = arith.constant 7.559290e-02 : f32
    %1 = vector.broadcast %cst : f32 to vector<8x7x5x5xf32>
    %2 = arith.mulf %0, %1 : vector<8x7x5x5xf32>
    %c0_3 = arith.constant 0 : index
    %c0_4 = arith.constant 0 : index
    %c0_5 = arith.constant 0 : index
    %c0_6 = arith.constant 0 : index
    %3 = vector.load %arg2[%c0_3, %c0_4, %c0_5, %c0_6] : memref<8x7x5x5xf32, #tpu.memory_space<vmem>>, vector<8x7x5x5xf32>
    tpu.vector_store %arg2[%c0_3, %c0_4, %c0_5, %c0_6], %2 {strides = array<i32>} : memref<8x7x5x5xf32, #tpu.memory_space<vmem>>, vector<8x7x5x5xf32>,
    return
  }
  func.func @transform_0(%arg0: i32) -> (i32, i32, i32, i32) {
    %c0_i32 = arith.constant 0 : i32
    %c0_i32_0 = arith.constant 0 : i32
    %c0_i32_1 = arith.constant 0 : i32
    %c0_i32_2 = arith.constant 0 : i32
    return %arg0, %c0_i32, %c0_i32_0, %c0_i32_1 : i32, i32, i32, i32
  }
  func.func @transform_1(%arg0: i32) -> (i32, i32, i32, i32) {
    %c0_i32 = arith.constant 0 : i32
    %c0_i32_0 = arith.constant 0 : i32
    %c0_i32_1 = arith.constant 0 : i32
    %c0_i32_2 = arith.constant 0 : i32
    return %arg0, %c0_i32, %c0_i32_0, %c0_i32_1 : i32, i32, i32, i32
  }
}

</mosaic_0001>

<llo_original>
// kernel: tpu_custom_call.1
$region0: #{tpu_custom_call.1}
  #allocation0 [shape = 'u32[]', space=smem, size = 0x4, offset = 0x4, fixed_abs, tag = 'smem constant byte address 0x4 - core index']
  #allocation1 [shape = 'u32[144,128]{1,0:T(1,128)}', space=vmem, size = 0x12000, scoped, tag = 'internal scratch']
  %s0 = inlined_call_operand.vmem [shape: f32[32,7,5,5], index: 0, kind: input, shape index: {}]
  %s1 = inlined_call_operand.vmem [shape: f32[32,7,5,5], index: 1, kind: output, shape index: {}]
  %s2 = sld [smem:[#allocation0]]
  $region37: #{tpu_custom_call.1} parent=0
    _
  %s4 = ssub.s32 1, %s2
  %s5 = scalar_select 0, %s4, %s2
  loop: start=0, step=1, limit=6
  $region2: #{tpu_custom_call.1} parent=0 // loop_pre_header
    _
  $region3: #{tpu_custom_call.1} parent=0 // loop_header
    %s7 = sphi 0, %s11
    %p8 = scmp.ge.s32.totalorder %s7, 6
    %s17 = sphi 0, %s19
    %s20 = sphi 0, %s17
    %s21 = sphi 0, %s20
    %s37 = sphi 0, %s21
    %s43 = sphi 0, %s45
    %s46 = sphi 0, %s43
    %s47 = sphi 0, %s46
    %s63 = sphi 0, %s47
  $region4: #{tpu_custom_call.1} parent=0 // loop_header_branch
    %10 = sbr.rel (%p8) target = $region8
  $region5: #{tpu_custom_call.1} parent=0 // loop_body
    %s12 = ssub.s32 %s7, 1
    %s13 = ssub.s32 %s7, 2
    %s14 = sadd.s32 %s7, 1
    %s15 = ssub.s32 %s7, %s14
    %p16 = scmp.eq.s32.totalorder %s15, 0
    %s18 = sadd.s32 %s17, 1
    %s19 = scalar_select %p16, %s17, %s18
    %p22 = pneg %p16
    %p23 = scmp.eq.s32.totalorder %s7, 3
    %p24 = por %p22, %p23
    %p25 = scmp.ne.s32.totalorder %s17, %s20
    %p26 = scmp.eq.s32.totalorder %s7, 0
    %p27 = por %p25, %p26
    %p28 = scmp.ne.s32.totalorder %s17, %s20
    %p29 = scmp.eq.s32.totalorder %s12, 3
    %p30 = por %p28, %p29
    %p31 = scmp.ne.s32.totalorder %s20, %s21
    %p32 = scmp.eq.s32.totalorder %s12, 0
    %p33 = por %p31, %p32
    %p34 = scmp.ne.s32.totalorder %s20, %s21
    %p35 = scmp.eq.s32.totalorder %s13, 3
    %p36 = por %p34, %p35
    %p38 = scmp.ne.s32.totalorder %s21, %s37
    %p39 = scmp.eq.s32.totalorder %s13, 0
    %p40 = por %p38, %p39
    %s41 = ssub.s32 %s7, %s14
    %p42 = scmp.eq.s32.totalorder %s41, 0
    %s44 = sadd.s32 %s43, 1
    %s45 = scalar_select %p42, %s43, %s44
    %p48 = pneg %p42
    %p49 = scmp.eq.s32.totalorder %s7, 3
    %p50 = por %p48, %p49
    %p51 = scmp.ne.s32.totalorder %s43, %s46
    %p52 = scmp.eq.s32.totalorder %s7, 0
    %p53 = por %p51, %p52
    %p54 = scmp.ne.s32.totalorder %s43, %s46
    %p55 = scmp.eq.s32.totalorder %s12, 3
    %p56 = por %p54, %p55
    %p57 = scmp.ne.s32.totalorder %s46, %s47
    %p58 = scmp.eq.s32.totalorder %s12, 0
    %p59 = por %p57, %p58
    %p60 = scmp.ne.s32.totalorder %s46, %s47
    %p61 = scmp.eq.s32.totalorder %s13, 3
    %p62 = por %p60, %p61
    %p64 = scmp.ne.s32.totalorder %s47, %s63
    %p65 = scmp.eq.s32.totalorder %s13, 0
    %p66 = por %p64, %p65
    %p67 = scmp.le.s32.totalorder 1, %s7
    %p68 = scmp.lt.s32.totalorder %s7, 5
    %p69 = pnand %p67, %p68
    %p70 = pneg %p69
    // Predicated region
    $region9: #{tpu_custom_call.1} parent=5 // pred_check
      _
    $region10: #{tpu_custom_call.1} parent=5 // pred_check_branch
      %72 = sbr.rel (%p69) target = $region12
    $region11: #{tpu_custom_call.1} parent=5 // pred_region
      %s73 = ssub.s32 %s7, 1
    $region12: #{tpu_custom_call.1} parent=5 // pred_fallthru
      _
    %p74 = scmp.lt.s32.totalorder %s7, 4
    // Predicated region
    $region13: #{tpu_custom_call.1} parent=5 // pred_check
      %p75 = pneg %p74
    $region14: #{tpu_custom_call.1} parent=5 // pred_check_branch
      %77 = sbr.rel (%p75) target = $region16
    $region15: #{tpu_custom_call.1} parent=5 // pred_region
      // Predicated region
      $region17: #{tpu_custom_call.1} parent=15 // pred_check
        %p78 = pneg %p27
      $region18: #{tpu_custom_call.1} parent=15 // pred_check_branch
        %80 = sbr.rel (%p78) target = $region20
      $region19: #{tpu_custom_call.1} parent=15 // pred_region
        %s81 = smul.u32 8, %s7
        %p82 = scmp.lt.s32.totalorder %s81, 31
        %s83 = scalar_select %p82, %s81, 31
        %s84 = smul.addr %s83, 7
        %s85 = smul.addr %s84, 8
        %s86 = scalar_lea.vmem %s0, %s85
        %s87 = smul.u32 8, %s7
      $region20: #{tpu_custom_call.1} parent=15 // pred_fallthru
        _
    $region16: #{tpu_custom_call.1} parent=5 // pred_fallthru
      _
    %p88 = scmp.le.s32.totalorder 1, %s7
    %p89 = scmp.lt.s32.totalorder %s7, 5
    %p90 = pnand %p88, %p89
    %p91 = pneg %p90
    // Predicated region
    $region21: #{tpu_custom_call.1} parent=5 // pred_check
      _
    $region22: #{tpu_custom_call.1} parent=5 // pred_check_branch
      %93 = sbr.rel (%p90) target = $region24
    $region23: #{tpu_custom_call.1} parent=5 // pred_region
      %s94 = ssub.s32 %s7, 1
      %s95 = smul.u32 8, %s12
      %p96 = scmp.lt.s32.totalorder %s95, 31
      %s97 = scalar_select %p96, %s95, 31
      %s98 = smul.addr %s97, 7
      %s99 = smul.addr %s98, 8
      %s100 = scalar_lea.vmem %s0, %s99
      %p101 = pneg %p33
      %p102 = pneg %p30
      %p103 = pneg %p59
      %p104 = pneg %p56
      %s105 = smul.u32 8, %s12
      %p106 = scmp.lt.s32.totalorder %s105, 31
      %s107 = scalar_select %p106, %s105, 31
      %s108 = smul.addr %s107, 7
      %s109 = smul.addr %s108, 8
      %s110 = scalar_lea.vmem %s1, %s109
      %s111 = smul.u32 8, %s12
      %p112 = scmp.lt.s32.totalorder %s111, 31
      %s113 = scalar_select %p112, %s111, 31
      %s114 = smul.addr %s113, 7
      %s115 = smul.addr %s114, 8
      %s116 = scalar_lea.vmem %s0, %s115
      %s117 = smul.u32 8, %s12
      %s118 = smul.u32 8, %s12
      %p119 = scmp.lt.s32.totalorder %s118, 31
      %s120 = scalar_select %p119, %s118, 31
      %s121 = smul.addr %s120, 7
      %s122 = smul.addr %s121, 8
      %s123 = scalar_lea.vmem %s1, %s122
      %s124 = smul.u32 8, %s12
      %v125 = vld [vmem:[%s116] sm:$0x1f]
      %v126 = vld [vmem:[%s116 + $0x8] sm:$0x1f]
      %v127 = vld [vmem:[%s116 + $0x10] sm:$0x1f]
      %v128 = vld [vmem:[%s116 + $0x18] sm:$0x1f]
      %v129 = vld [vmem:[%s116 + $0x20] sm:$0x1f]
      %v130 = vld [vmem:[%s116 + $0x28] sm:$0x1f]
      %v131 = vld [vmem:[%s116 + $0x30] sm:$0x1f]
      %v132 = vld [vmem:[%s116 + $0x38] sm:$0x1f]
      %v133 = vld [vmem:[%s116 + $0x40] sm:$0x1f]
      %v134 = vld [vmem:[%s116 + $0x48] sm:$0x1f]
      %v135 = vld [vmem:[%s116 + $0x50] sm:$0x1f]
      %v136 = vld [vmem:[%s116 + $0x58] sm:$0x1f]
      %v137 = vld [vmem:[%s116 + $0x60] sm:$0x1f]
      %v138 = vld [vmem:[%s116 + $0x68] sm:$0x1f]
      %v139 = vld [vmem:[%s116 + $0x70] sm:$0x1f]
      %v140 = vld [vmem:[%s116 + $0x78] sm:$0x1f]
      %v141 = vld [vmem:[%s116 + $0x80] sm:$0x1f]
      %v142 = vld [vmem:[%s116 + $0x88] sm:$0x1f]
      %v143 = vld [vmem:[%s116 + $0x90] sm:$0x1f]
      %v144 = vld [vmem:[%s116 + $0x98] sm:$0x1f]
      %v145 = vld [vmem:[%s116 + $0xa0] sm:$0x1f]
      %v146 = vld [vmem:[%s116 + $0xa8] sm:$0x1f]
      %v147 = vld [vmem:[%s116 + $0xb0] sm:$0x1f]
      %v148 = vld [vmem:[%s116 + $0xb8] sm:$0x1f]
      %v149 = vld [vmem:[%s116 + $0xc0] sm:$0x1f]
      %v150 = vld [vmem:[%s116 + $0xc8] sm:$0x1f]
      %v151 = vld [vmem:[%s116 + $0xd0] sm:$0x1f]
      %v152 = vld [vmem:[%s116 + $0xd8] sm:$0x1f]
      %v153 = vld [vmem:[%s116 + $0xe0] sm:$0x1f]
      %v154 = vld [vmem:[%s116 + $0xe8] sm:$0x1f]
      %v155 = vld [vmem:[%s116 + $0xf0] sm:$0x1f]
      %v156 = vld [vmem:[%s116 + $0xf8] sm:$0x1f]
      %v157 = vld [vmem:[%s116 + $0x100] sm:$0x1f]
      %v158 = vld [vmem:[%s116 + $0x108] sm:$0x1f]
      %v159 = vld [vmem:[%s116 + $0x110] sm:$0x1f]
      %v160 = vld [vmem:[%s116 + $0x118] sm:$0x1f]
      %v161 = vld [vmem:[%s116 + $0x120] sm:$0x1f]
      %v162 = vld [vmem:[%s116 + $0x128] sm:$0x1f]
      %v163 = vld [vmem:[%s116 + $0x130] sm:$0x1f]
      %v164 = vld [vmem:[%s116 + $0x138] sm:$0x1f]
      %v165 = vld [vmem:[%s116 + $0x140] sm:$0x1f]
      %v166 = vld [vmem:[%s116 + $0x148] sm:$0x1f]
      %v167 = vld [vmem:[%s116 + $0x150] sm:$0x1f]
      %v168 = vld [vmem:[%s116 + $0x158] sm:$0x1f]
      %v169 = vld [vmem:[%s116 + $0x160] sm:$0x1f]
      %v170 = vld [vmem:[%s116 + $0x168] sm:$0x1f]
      %v171 = vld [vmem:[%s116 + $0x170] sm:$0x1f]
      %v172 = vld [vmem:[%s116 + $0x178] sm:$0x1f]
      %v173 = vld [vmem:[%s116 + $0x180] sm:$0x1f]
      %v174 = vld [vmem:[%s116 + $0x188] sm:$0x1f]
      %v175 = vld [vmem:[%s116 + $0x190] sm:$0x1f]
      %v176 = vld [vmem:[%s116 + $0x198] sm:$0x1f]
      %v177 = vld [vmem:[%s116 + $0x1a0] sm:$0x1f]
      %v178 = vld [vmem:[%s116 + $0x1a8] sm:$0x1f]
      %v179 = vld [vmem:[%s116 + $0x1b0] sm:$0x1f]
      %v180 = vld [vmem:[%s116 + $0x1b8] sm:$0x1f]
      %v181 = vmul.f32 %v125, 0.0755929
      %v182 = vmul.f32 %v126, 0.0755929
      %v183 = vmul.f32 %v127, 0.0755929
      %v184 = vmul.f32 %v128, 0.0755929
      %v185 = vmul.f32 %v129, 0.0755929
      %v186 = vmul.f32 %v130, 0.0755929
      %v187 = vmul.f32 %v131, 0.0755929
      %v188 = vmul.f32 %v132, 0.0755929
      %v189 = vmul.f32 %v133, 0.0755929
      %v190 = vmul.f32 %v134, 0.0755929
      %v191 = vmul.f32 %v135, 0.0755929
      %v192 = vmul.f32 %v136, 0.0755929
      %v193 = vmul.f32 %v137, 0.0755929
      %v194 = vmul.f32 %v138, 0.0755929
      %v195 = vmul.f32 %v139, 0.0755929
      %v196 = vmul.f32 %v140, 0.0755929
      %v197 = vmul.f32 %v141, 0.0755929
      %v198 = vmul.f32 %v142, 0.0755929
      %v199 = vmul.f32 %v143, 0.0755929
      %v200 = vmul.f32 %v144, 0.0755929
      %v201 = vmul.f32 %v145, 0.0755929
      %v202 = vmul.f32 %v146, 0.0755929
      %v203 = vmul.f32 %v147, 0.0755929
      %v204 = vmul.f32 %v148, 0.0755929
      %v205 = vmul.f32 %v149, 0.0755929
      %v206 = vmul.f32 %v150, 0.0755929
      %v207 = vmul.f32 %v151, 0.0755929
      %v208 = vmul.f32 %v152, 0.0755929
      %v209 = vmul.f32 %v153, 0.0755929
      %v210 = vmul.f32 %v154, 0.0755929
      %v211 = vmul.f32 %v155, 0.0755929
      %v212 = vmul.f32 %v156, 0.0755929
      %v213 = vmul.f32 %v157, 0.0755929
      %v214 = vmul.f32 %v158, 0.0755929
      %v215 = vmul.f32 %v159, 0.0755929
      %v216 = vmul.f32 %v160, 0.0755929
      %v217 = vmul.f32 %v161, 0.0755929
      %v218 = vmul.f32 %v162, 0.0755929
      %v219 = vmul.f32 %v163, 0.0755929
      %v220 = vmul.f32 %v164, 0.0755929
      %v221 = vmul.f32 %v165, 0.0755929
      %v222 = vmul.f32 %v166, 0.0755929
      %v223 = vmul.f32 %v167, 0.0755929
      %v224 = vmul.f32 %v168, 0.0755929
      %v225 = vmul.f32 %v169, 0.0755929
      %v226 = vmul.f32 %v170, 0.0755929
      %v227 = vmul.f32 %v171, 0.0755929
      %v228 = vmul.f32 %v172, 0.0755929
      %v229 = vmul.f32 %v173, 0.0755929
      %v230 = vmul.f32 %v174, 0.0755929
      %v231 = vmul.f32 %v175, 0.0755929
      %v232 = vmul.f32 %v176, 0.0755929
      %v233 = vmul.f32 %v177, 0.0755929
      %v234 = vmul.f32 %v178, 0.0755929
      %v235 = vmul.f32 %v179, 0.0755929
      %v236 = vmul.f32 %v180, 0.0755929
      %vm237 = vcmask 36864
      %238 = vst.msk [vmem:[%s123] sm:$0x1f] %vm237, %v181
      %239 = vst.msk [vmem:[%s123 + $0x8] sm:$0x1f] %vm237, %v182
      %240 = vst.msk [vmem:[%s123 + $0x10] sm:$0x1f] %vm237, %v183
      %241 = vst.msk [vmem:[%s123 + $0x18] sm:$0x1f] %vm237, %v184
      %242 = vst.msk [vmem:[%s123 + $0x20] sm:$0x1f] %vm237, %v185
      %243 = vst.msk [vmem:[%s123 + $0x28] sm:$0x1f] %vm237, %v186
      %244 = vst.msk [vmem:[%s123 + $0x30] sm:$0x1f] %vm237, %v187
      %245 = vst.msk [vmem:[%s123 + $0x38] sm:$0x1f] %vm237, %v188
      %246 = vst.msk [vmem:[%s123 + $0x40] sm:$0x1f] %vm237, %v189
      %247 = vst.msk [vmem:[%s123 + $0x48] sm:$0x1f] %vm237, %v190
      %248 = vst.msk [vmem:[%s123 + $0x50] sm:$0x1f] %vm237, %v191
      %249 = vst.msk [vmem:[%s123 + $0x58] sm:$0x1f] %vm237, %v192
      %250 = vst.msk [vmem:[%s123 + $0x60] sm:$0x1f] %vm237, %v193
      %251 = vst.msk [vmem:[%s123 + $0x68] sm:$0x1f] %vm237, %v194
      %252 = vst.msk [vmem:[%s123 + $0x70] sm:$0x1f] %vm237, %v195
      %253 = vst.msk [vmem:[%s123 + $0x78] sm:$0x1f] %vm237, %v196
      %254 = vst.msk [vmem:[%s123 + $0x80] sm:$0x1f] %vm237, %v197
      %255 = vst.msk [vmem:[%s123 + $0x88] sm:$0x1f] %vm237, %v198
      %256 = vst.msk [vmem:[%s123 + $0x90] sm:$0x1f] %vm237, %v199
      %257 = vst.msk [vmem:[%s123 + $0x98] sm:$0x1f] %vm237, %v200
      %258 = vst.msk [vmem:[%s123 + $0xa0] sm:$0x1f] %vm237, %v201
      %259 = vst.msk [vmem:[%s123 + $0xa8] sm:$0x1f] %vm237, %v202
      %260 = vst.msk [vmem:[%s123 + $0xb0] sm:$0x1f] %vm237, %v203
      %261 = vst.msk [vmem:[%s123 + $0xb8] sm:$0x1f] %vm237, %v204
      %262 = vst.msk [vmem:[%s123 + $0xc0] sm:$0x1f] %vm237, %v205
      %263 = vst.msk [vmem:[%s123 + $0xc8] sm:$0x1f] %vm237, %v206
      %264 = vst.msk [vmem:[%s123 + $0xd0] sm:$0x1f] %vm237, %v207
      %265 = vst.msk [vmem:[%s123 + $0xd8] sm:$0x1f] %vm237, %v208
      %266 = vst.msk [vmem:[%s123 + $0xe0] sm:$0x1f] %vm237, %v209
      %267 = vst.msk [vmem:[%s123 + $0xe8] sm:$0x1f] %vm237, %v210
      %268 = vst.msk [vmem:[%s123 + $0xf0] sm:$0x1f] %vm237, %v211
      %269 = vst.msk [vmem:[%s123 + $0xf8] sm:$0x1f] %vm237, %v212
      %270 = vst.msk [vmem:[%s123 + $0x100] sm:$0x1f] %vm237, %v213
      %271 = vst.msk [vmem:[%s123 + $0x108] sm:$0x1f] %vm237, %v214
      %272 = vst.msk [vmem:[%s123 + $0x110] sm:$0x1f] %vm237, %v215
      %273 = vst.msk [vmem:[%s123 + $0x118] sm:$0x1f] %vm237, %v216
      %274 = vst.msk [vmem:[%s123 + $0x120] sm:$0x1f] %vm237, %v217
      %275 = vst.msk [vmem:[%s123 + $0x128] sm:$0x1f] %vm237, %v218
      %276 = vst.msk [vmem:[%s123 + $0x130] sm:$0x1f] %vm237, %v219
      %277 = vst.msk [vmem:[%s123 + $0x138] sm:$0x1f] %vm237, %v220
      %278 = vst.msk [vmem:[%s123 + $0x140] sm:$0x1f] %vm237, %v221
      %279 = vst.msk [vmem:[%s123 + $0x148] sm:$0x1f] %vm237, %v222
      %280 = vst.msk [vmem:[%s123 + $0x150] sm:$0x1f] %vm237, %v223
      %281 = vst.msk [vmem:[%s123 + $0x158] sm:$0x1f] %vm237, %v224
      %282 = vst.msk [vmem:[%s123 + $0x160] sm:$0x1f] %vm237, %v225
      %283 = vst.msk [vmem:[%s123 + $0x168] sm:$0x1f] %vm237, %v226
      %284 = vst.msk [vmem:[%s123 + $0x170] sm:$0x1f] %vm237, %v227
      %285 = vst.msk [vmem:[%s123 + $0x178] sm:$0x1f] %vm237, %v228
      %286 = vst.msk [vmem:[%s123 + $0x180] sm:$0x1f] %vm237, %v229
      %287 = vst.msk [vmem:[%s123 + $0x188] sm:$0x1f] %vm237, %v230
      %288 = vst.msk [vmem:[%s123 + $0x190] sm:$0x1f] %vm237, %v231
      %289 = vst.msk [vmem:[%s123 + $0x198] sm:$0x1f] %vm237, %v232
      %290 = vst.msk [vmem:[%s123 + $0x1a0] sm:$0x1f] %vm237, %v233
      %291 = vst.msk [vmem:[%s123 + $0x1a8] sm:$0x1f] %vm237, %v234
      %292 = vst.msk [vmem:[%s123 + $0x1b0] sm:$0x1f] %vm237, %v235
      %293 = vst.msk [vmem:[%s123 + $0x1b8] sm:$0x1f] %vm237, %v236
      %s294 = smul.u32 8, %s12
      %p295 = scmp.lt.s32.totalorder %s294, 31
      %s296 = scalar_select %p295, %s294, 31
      %s297 = smul.addr %s296, 7
      %s298 = smul.addr %s297, 8
      %s299 = scalar_lea.vmem %s1, %s298
      // Predicated region
      $region25: #{tpu_custom_call.1} parent=23 // pred_check
        %p300 = pneg %p56
      $region26: #{tpu_custom_call.1} parent=23 // pred_check_branch
        %302 = sbr.rel (%p300) target = $region28
      $region27: #{tpu_custom_call.1} parent=23 // pred_region
        %s303 = smul.u32 8, %s12
      $region28: #{tpu_custom_call.1} parent=23 // pred_fallthru
        _
    $region24: #{tpu_custom_call.1} parent=5 // pred_fallthru
      _
    %p304 = scmp.le.s32.totalorder 2, %s7
    // Predicated region
    $region29: #{tpu_custom_call.1} parent=5 // pred_check
      %p305 = pneg %p304
    $region30: #{tpu_custom_call.1} parent=5 // pred_check_branch
      %307 = sbr.rel (%p305) target = $region32
    $region31: #{tpu_custom_call.1} parent=5 // pred_region
      %s308 = ssub.s32 %s7, 2
      // Predicated region
      $region33: #{tpu_custom_call.1} parent=31 // pred_check
        %p309 = pneg %p62
      $region34: #{tpu_custom_call.1} parent=31 // pred_check_branch
        %311 = sbr.rel (%p309) target = $region36
      $region35: #{tpu_custom_call.1} parent=31 // pred_region
        %s312 = smul.u32 8, %s13
        %p313 = scmp.lt.s32.totalorder %s312, 31
        %s314 = scalar_select %p313, %s312, 31
        %s315 = smul.addr %s314, 7
        %s316 = smul.addr %s315, 8
        %s317 = scalar_lea.vmem %s1, %s316
      $region36: #{tpu_custom_call.1} parent=31 // pred_fallthru
        _
    $region32: #{tpu_custom_call.1} parent=5 // pred_fallthru
      _
  $region6: #{tpu_custom_call.1} parent=0 // loop_footer
    %s11 = sadd.s32 1, %s7
  $region7: #{tpu_custom_call.1} parent=0 // loop_footer_branch
    %6 = sbr.rel target = $region3
  $region8: #{tpu_custom_call.1} parent=0 // loop_exit
    _

</llo_original>
